<compile_context>
chip_gen: v6e
topology: v6e:2x2x1
jax: 0.10.0
libtpu: 0.0.40
codegen_flags: <defaults>
</compile_context>

<pallas_src>
import functools
import math

import jax
import jax.numpy as jnp
from jax.experimental import pallas as pl
from jax.experimental.pallas import tpu as pltpu

LN_EPS = 1e-5  # torch.nn.LayerNorm default eps


def _gelu_tanh(x):
    # TODO(synk): the reference `Gelu` class body is not given; using the BERT-style tanh
    # approximation. Swap to 0.5*x*(1+erf(x/sqrt(2))) if the reference uses exact GELU.
    c = math.sqrt(2.0 / math.pi)
    return 0.5 * x * (1.0 + jnp.tanh(c * (x + 0.044715 * x * x * x)))


def _kernel(x_ref, w_ref, params_ref, pe_ref, alpha_ref, o_ref, *, d_real):
    # x_ref:      (TR, F_pad)    input rows (one batch element, one time tile)
    # w_ref:      (F_pad, D_pad) linear weight (stored as torch_weight.T)
    # params_ref: (3, D_pad)     [bias; ln_gamma; ln_beta]
    # pe_ref:     (TR, D_pad)    positional-encoding tile for this time tile
    # alpha_ref:  (1,) in SMEM   ScaledPositionalEncoding alpha
    # o_ref:      (TR, D_pad)

    # Linear on the MXU; native-dtype operands, f32 accumulation.
    y = jnp.dot(x_ref[...], w_ref[...], preferred_element_type=jnp.float32)
    y = y + params_ref[0:1, :].astype(jnp.float32)  # bias

    # LayerNorm over the real feature dim. Padded columns of y are exactly zero
    # (zero weight columns + zero bias), so sums over D_pad equal sums over D.
    inv_d = 1.0 / d_real
    mean = jnp.sum(y, axis=-1, keepdims=True) * inv_d
    var = jnp.sum(y * y, axis=-1, keepdims=True) * inv_d - mean * mean
    var = jnp.maximum(var, 0.0)
    yn = (y - mean) * jax.lax.rsqrt(var + LN_EPS)
    yn = yn * params_ref[1:2, :].astype(jnp.float32) + params_ref[2:3, :].astype(jnp.float32)

    # Dropout(p=0.0) is identity; Gelu; then scaled positional encoding.
    g = _gelu_tanh(yn)
    out = g + alpha_ref[0] * pe_ref[...].astype(jnp.float32)
    o_ref[...] = out.astype(o_ref.dtype)


def make_positional_encoding(T, D, dtype=jnp.float32):
    """Same construction as PositionalEncoding.extend_pe (first T rows)."""
    position = jnp.arange(T, dtype=jnp.float32)[:, None]                    # (T, 1)
    div_term = jnp.exp(jnp.arange(0, D, 2, dtype=jnp.float32)
                       * -(math.log(10000.0) / D))                          # (D/2,)
    pe = jnp.zeros((T, D), dtype=jnp.float32)
    pe = pe.at[:, 0::2].set(jnp.sin(position * div_term))
    pe = pe.at[:, 1::2].set(jnp.cos(position * div_term))
    return pe.astype(dtype)


def _round_up(x, m):
    return (x + m - 1) // m * m


def linear_with_pos_embedding(inputs, mask, w, b, gamma, beta, alpha, *, row_tile=256):
    """inputs: (B, T, F); w: (F, D) (= torch weight.T); b/gamma/beta: (D,); alpha: (1,)."""
    B, T, F = inputs.shape
    D = w.shape[1]

    # Lane-dense / (8,128)-aligned padding.
    F_pad = _round_up(F, 128)
    D_pad = _round_up(D, 128)
    TR = min(row_tile, _round_up(T, 8))      # row tile: multiple of 8, capped at row_tile
    T_pad = _round_up(T, TR)
    n_row_tiles = T_pad // TR

    x_p = jnp.pad(inputs, ((0, 0), (0, T_pad - T), (0, F_pad - F)))
    w_p = jnp.pad(w, ((0, F_pad - F), (0, D_pad - D)))
    params = jnp.stack([
        jnp.pad(b.astype(jnp.float32), (0, D_pad - D)),
        jnp.pad(gamma.astype(jnp.float32), (0, D_pad - D)),
        jnp.pad(beta.astype(jnp.float32), (0, D_pad - D)),
    ], axis=0)                                                              # (3, D_pad)
    pe = jnp.pad(make_positional_encoding(T_pad, D), ((0, 0), (0, D_pad - D)))
    alpha = alpha.astype(jnp.float32).reshape((1,))

    kernel = functools.partial(_kernel, d_real=float(D))

    out_p = pl.pallas_call(
        kernel,
        out_shape=jax.ShapeDtypeStruct((B, T_pad, D_pad), inputs.dtype),
        grid_spec=pltpu.PrefetchScalarGridSpec(
            num_scalar_prefetch=0,
            grid=(B, n_row_tiles),
            in_specs=[
                pl.BlockSpec((pl.Squeezed(), TR, F_pad), lambda bi, ti: (bi, ti, 0)),  # x
                pl.BlockSpec((F_pad, D_pad), lambda bi, ti: (0, 0)),                   # W
                pl.BlockSpec((3, D_pad), lambda bi, ti: (0, 0)),                       # bias/gamma/beta
                pl.BlockSpec((TR, D_pad), lambda bi, ti: (ti, 0)),                     # PE tile
                pl.BlockSpec(memory_space=pltpu.MemorySpace.SMEM),                     # alpha scalar
            ],
            out_specs=pl.BlockSpec((pl.Squeezed(), TR, D_pad), lambda bi, ti: (bi, ti, 0)),
        ),
        compiler_params=pltpu.CompilerParams(
            dimension_semantics=("parallel", "parallel"),
            vmem_limit_bytes=64 * 1024 * 1024,
        ),
    )(x_p, w_p, params, pe, alpha)

    return out_p[:, :T, :D], mask


def _reference(inputs, w, b, gamma, beta, alpha):
    """Plain-JAX forward for correctness checking."""
    B, T, F = inputs.shape
    D = w.shape[1]
    y = jnp.einsum("btf,fd->btd", inputs, w) + b
    mean = jnp.mean(y, axis=-1, keepdims=True)
    var = jnp.mean((y - mean) ** 2, axis=-1, keepdims=True)
    yn = (y - mean) / jnp.sqrt(var + LN_EPS) * gamma + beta
    g = _gelu_tanh(yn)
    pe = make_positional_encoding(T, D)
    return g + alpha[0] * pe[None]


if __name__ == "__main__":
    B, T, F, D = 2, 8, 32, 32
    key = jax.random.PRNGKey(0)
    k_x, k_w, k_b = jax.random.split(key, 3)

    inputs = jax.random.normal(k_x, (B, T, F), dtype=jnp.float32)
    mask = jnp.ones((B, T), dtype=jnp.bool_)

    # Linear weight: xavier_normal_ (std = sqrt(2/(fan_in+fan_out))), stored as (F, D) = torch_weight.T.
    w = jax.random.normal(k_w, (F, D), dtype=jnp.float32) * math.sqrt(2.0 / (F + D))
    # Linear bias: torch default uniform(-1/sqrt(F), 1/sqrt(F)).
    bound = 1.0 / math.sqrt(F)
    b = jax.random.uniform(k_b, (D,), dtype=jnp.float32, minval=-bound, maxval=bound)
    # LayerNorm params (torch defaults).
    gamma = jnp.ones((D,), dtype=jnp.float32)
    beta = jnp.zeros((D,), dtype=jnp.float32)
    # ScaledPositionalEncoding alpha.
    alpha = jnp.ones((1,), dtype=jnp.float32)

    out, mask_out = linear_with_pos_embedding(inputs, mask, w, b, gamma, beta, alpha)
    jax.block_until_ready(out)
    jax.block_until_ready(mask_out)

    assert out.shape == (B, T, D)
    assert mask_out.shape == mask.shape

    ref = _reference(inputs, w, b, gamma, beta, alpha)
    err = float(jnp.max(jnp.abs(out - ref)))
    assert err < 1e-3, f"max abs error vs reference: {err}"

    print("KERNEL_OK")
</pallas_src>

<mosaic_0001>
module attributes {stable_mosaic.version = 11 : i64} {
  func.func @_kernel(%arg0: i32, %arg1: i32, %arg2: memref<1x8x128xf32, #tpu.memory_space<vmem>>, %arg3: memref<128x128xf32, #tpu.memory_space<vmem>>, %arg4: memref<3x128xf32, #tpu.memory_space<vmem>>, %arg5: memref<8x128xf32, #tpu.memory_space<vmem>>, %arg6: memref<1xf32, #tpu.memory_space<smem>>, %arg7: memref<1x8x128xf32, #tpu.memory_space<vmem>>) attributes {dimension_semantics = [#tpu.dimension_semantics<parallel>, #tpu.dimension_semantics<parallel>], iteration_bounds = array<i64: 2, 1>, scalar_prefetch = 0 : i64, scratch_operands = 0 : i64, tpu.core_type = #tpu.core_type<tc>, window_params = [{transform_indices = @transform_0, window_bounds = array<i64: 1, 8, 128>}, {pipeline_mode = #tpu.pipeline_mode<synchronous>, transform_indices = @transform_1, window_bounds = array<i64: 128, 128>}, {pipeline_mode = #tpu.pipeline_mode<synchronous>, transform_indices = @transform_2, window_bounds = array<i64: 3, 128>}, {transform_indices = @transform_3, window_bounds = array<i64: 8, 128>}, {transform_indices = @transform_4, window_bounds = array<i64: 1>}, {transform_indices = @transform_5, window_bounds = array<i64: 1, 8, 128>}]} {
    %c0 = arith.constant 0 : index
    %c0_0 = arith.constant 0 : index
    %c0_1 = arith.constant 0 : index
    %0 = vector.load %arg2[%c0, %c0_0, %c0_1] : memref<1x8x128xf32, #tpu.memory_space<vmem>>, vector<1x8x128xf32>
    %1 = vector.shape_cast %0 : vector<1x8x128xf32> to vector<8x128xf32>
    %c0_2 = arith.constant 0 : index
    %c0_3 = arith.constant 0 : index
    %2 = vector.load %arg3[%c0_2, %c0_3] : memref<128x128xf32, #tpu.memory_space<vmem>>, vector<128x128xf32>
    %cst = arith.constant dense<0.000000e+00> : vector<8x128xf32>
    %3 = tpu.matmul %1, %2, %cst {dimension_numbers = #tpu.dot_dimension_numbers<[1], [0], [0], [1], [0, 0, 1, 1], [], []>} : vector<8x128xf32>, vector<128x128xf32>, vector<8x128xf32> -> vector<8x128xf32>
    %c0_4 = arith.constant 0 : index
    %c0_5 = arith.constant 0 : index
    %4 = vector.load %arg4[%c0_4, %c0_5] : memref<3x128xf32, #tpu.memory_space<vmem>>, vector<1x128xf32>
    %5 = vector.broadcast %4 : vector<1x128xf32> to vector<8x128xf32>
    %6 = arith.addf %3, %5 : vector<8x128xf32>
    %cst_6 = arith.constant dense<0.000000e+00> : vector<8xf32>
    %7 = vector.multi_reduction <add>, %6, %cst_6 [1] : vector<8x128xf32> to vector<8xf32>
    %8 = vector.shape_cast %7 : vector<8xf32> to vector<8x1xf32>
    %cst_7 = arith.constant 3.125000e-02 : f32
    %9 = vector.broadcast %cst_7 : f32 to vector<8x1xf32>
    %10 = arith.mulf %8, %9 : vector<8x1xf32>
    %11 = arith.mulf %6, %6 : vector<8x128xf32>
    %cst_8 = arith.constant dense<0.000000e+00> : vector<8xf32>
    %12 = vector.multi_reduction <add>, %11, %cst_8 [1] : vector<8x128xf32> to vector<8xf32>
    %13 = vector.shape_cast %12 : vector<8xf32> to vector<8x1xf32>
    %cst_9 = arith.constant 3.125000e-02 : f32
    %14 = vector.broadcast %cst_9 : f32 to vector<8x1xf32>
    %15 = arith.mulf %13, %14 : vector<8x1xf32>
    %16 = arith.mulf %10, %10 : vector<8x1xf32>
    %17 = arith.subf %15, %16 : vector<8x1xf32>
    %cst_10 = arith.constant 0.000000e+00 : f32
    %18 = vector.broadcast %cst_10 : f32 to vector<8x1xf32>
    %19 = arith.maximumf %17, %18 : vector<8x1xf32>
    %20 = vector.broadcast %10 : vector<8x1xf32> to vector<8x128xf32>
    %21 = arith.subf %6, %20 : vector<8x128xf32>
    %cst_11 = arith.constant 9.99999974E-6 : f32
    %22 = vector.broadcast %cst_11 : f32 to vector<8x1xf32>
    %23 = arith.addf %19, %22 : vector<8x1xf32>
    %24 = math.rsqrt %23 : vector<8x1xf32>
    %25 = vector.broadcast %24 : vector<8x1xf32> to vector<8x128xf32>
    %26 = arith.mulf %21, %25 : vector<8x128xf32>
    %c1 = arith.constant 1 : index
    %c0_12 = arith.constant 0 : index
    %27 = vector.load %arg4[%c1, %c0_12] : memref<3x128xf32, #tpu.memory_space<vmem>>, vector<1x128xf32>
    %28 = vector.broadcast %27 : vector<1x128xf32> to vector<8x128xf32>
    %29 = arith.mulf %26, %28 : vector<8x128xf32>
    %c2 = arith.constant 2 : index
    %c0_13 = arith.constant 0 : index
    %30 = vector.load %arg4[%c2, %c0_13] : memref<3x128xf32, #tpu.memory_space<vmem>>, vector<1x128xf32>
    %31 = vector.broadcast %30 : vector<1x128xf32> to vector<8x128xf32>
    %32 = arith.addf %29, %31 : vector<8x128xf32>
    %cst_14 = arith.constant 5.000000e-01 : f32
    %33 = vector.broadcast %cst_14 : f32 to vector<8x128xf32>
    %34 = arith.mulf %33, %32 : vector<8x128xf32>
    %cst_15 = arith.constant 4.471500e-02 : f32
    %35 = vector.broadcast %cst_15 : f32 to vector<8x128xf32>
    %36 = arith.mulf %35, %32 : vector<8x128xf32>
    %37 = arith.mulf %36, %32 : vector<8x128xf32>
    %38 = arith.mulf %37, %32 : vector<8x128xf32>
    %39 = arith.addf %32, %38 : vector<8x128xf32>
    %cst_16 = arith.constant 0.797884583 : f32
    %40 = vector.broadcast %cst_16 : f32 to vector<8x128xf32>
    %41 = arith.mulf %40, %39 : vector<8x128xf32>
    %42 = math.tanh %41 : vector<8x128xf32>
    %cst_17 = arith.constant 1.000000e+00 : f32
    %43 = vector.broadcast %cst_17 : f32 to vector<8x128xf32>
    %44 = arith.addf %43, %42 : vector<8x128xf32>
    %45 = arith.mulf %34, %44 : vector<8x128xf32>
    %c0_18 = arith.constant 0 : index
    %46 = memref.load %arg6[%c0_18] : memref<1xf32, #tpu.memory_space<smem>>
    %c0_19 = arith.constant 0 : index
    %c0_20 = arith.constant 0 : index
    %47 = vector.load %arg5[%c0_19, %c0_20] : memref<8x128xf32, #tpu.memory_space<vmem>>, vector<8x128xf32>
    %48 = vector.broadcast %46 : f32 to vector<8x128xf32>
    %49 = arith.mulf %48, %47 : vector<8x128xf32>
    %50 = arith.addf %45, %49 : vector<8x128xf32>
    %c0_21 = arith.constant 0 : index
    %c0_22 = arith.constant 0 : index
    %c0_23 = arith.constant 0 : index
    %51 = vector.load %arg7[%c0_21, %c0_22, %c0_23] : memref<1x8x128xf32, #tpu.memory_space<vmem>>, vector<1x8x128xf32>
    %52 = vector.shape_cast %51 : vector<1x8x128xf32> to vector<8x128xf32>
    %53 = vector.shape_cast %50 : vector<8x128xf32> to vector<1x8x128xf32>
    tpu.vector_store %arg7[%c0_21, %c0_22, %c0_23], %53 {strides = array<i32>} : memref<1x8x128xf32, #tpu.memory_space<vmem>>, vector<1x8x128xf32>,
    return
  }
  func.func @transform_0(%arg0: i32, %arg1: i32) -> (i32, i32, i32) {
    %c0_i32 = arith.constant 0 : i32
    %c0_i32_0 = arith.constant 0 : i32
    return %arg0, %arg1, %c0_i32 : i32, i32, i32
  }
  func.func @transform_1(%arg0: i32, %arg1: i32) -> (i32, i32) {
    %c0_i32 = arith.constant 0 : i32
    %c0_i32_0 = arith.constant 0 : i32
    %c0_i32_1 = arith.constant 0 : i32
    return %c0_i32, %c0_i32_0 : i32, i32
  }
  func.func @transform_2(%arg0: i32, %arg1: i32) -> (i32, i32) {
    %c0_i32 = arith.constant 0 : i32
    %c0_i32_0 = arith.constant 0 : i32
    %c0_i32_1 = arith.constant 0 : i32
    return %c0_i32, %c0_i32_0 : i32, i32
  }
  func.func @transform_3(%arg0: i32, %arg1: i32) -> (i32, i32) {
    %c0_i32 = arith.constant 0 : i32
    %c0_i32_0 = arith.constant 0 : i32
    return %arg1, %c0_i32 : i32, i32
  }
  func.func @transform_4(%arg0: i32, %arg1: i32) -> i32 {
    %c0_i32 = arith.constant 0 : i32
    %c0_i32_0 = arith.constant 0 : i32
    return %c0_i32 : i32
  }
  func.func @transform_5(%arg0: i32, %arg1: i32) -> (i32, i32, i32) {
    %c0_i32 = arith.constant 0 : i32
    %c0_i32_0 = arith.constant 0 : i32
    return %arg0, %arg1, %c0_i32 : i32, i32, i32
  }
}

</mosaic_0001>

<llo_original>
// kernel: tpu_custom_call.1
$region0: #{tpu_custom_call.1}
  #allocation0 [shape = 'u32[]', space=smem, size = 0x4, offset = 0x4, fixed_abs, tag = 'smem constant byte address 0x4 - core index']
  #allocation1 [shape = 'u32[144,128]{1,0:T(1,128)}', space=vmem, size = 0x12000, scoped, tag = 'internal scratch']
  #allocation2 [shape = 'f32[1]{0:T(128)S(6)}', space=smem, size = 0x200, scoped, tag = 'scoped memory for tpu_custom_call.1']
  %s0 = inlined_call_operand.hbm [shape: f32[2,8,128], index: 0, kind: input, shape index: {}]
  %s1 = inlined_call_operand.hbm [shape: f32[128,128], index: 1, kind: input, shape index: {}]
  %s2 = inlined_call_operand.vmem [shape: f32[3,128], index: 2, kind: input, shape index: {}]
  %s3 = inlined_call_operand.hbm [shape: f32[8,128], index: 3, kind: input, shape index: {}]
  %s4 = inlined_call_operand.<no memory space> [shape: f32[1], index: 4, kind: input, shape index: {}]
  %s5 = inlined_call_operand.hbm [shape: f32[2,8,128], index: 5, kind: output, shape index: {}]
  %s6 = sld [smem:[#allocation0]]
  $region65: #{tpu_custom_call.1} parent=0
    _
  %s8 = ssub.s32 1, %s6
  %s9 = scalar_select 0, %s8, %s6
  %10 = sst [smem:[#allocation2]] %s4
  $region1: #{tpu_custom_call.1} parent=0
    #allocation3 [shape = 'u8[8192]{0}', space=vmem, size = 0x2000, scoped, tag = 'input window, operand 0']
    #allocation4 [shape = 's32[2]{0}', space=sflag, size = 0x8, scoped, tag = 'scoped memory for tpu_custom_call.1']
    #allocation5 [shape = 's32[2]{0}', space=sflag, size = 0x8, scoped, tag = 'scoped memory for tpu_custom_call.1']
    #allocation6 [shape = 'u8[65536]{0}', space=vmem, size = 0x10000, scoped, tag = 'input window, operand 1, single buffered']
    #allocation7 [shape = 's32[1]{0}', space=sflag, size = 0x4, scoped, tag = 'scoped memory for tpu_custom_call.1']
    #allocation8 [shape = 'u8[4096]{0}', space=vmem, size = 0x1000, scoped, tag = 'input window, operand 3, single buffered']
    #allocation9 [shape = 'u8[8192]{0}', space=vmem, size = 0x2000, scoped, tag = 'output window, operand 0']
    %11 = vsyncpa [#allocation4], 0
    %s12 = scalar_lea.sflag [#allocation4], 1
    %13 = vsyncpa %s12, 0
    %14 = vsyncpa [#allocation7], 0
    %15 = vsyncpa [#allocation5], 0
    %s16 = scalar_lea.sflag [#allocation5], 1
    %17 = vsyncpa %s16, 0
    loop: start=0, step=1, limit=4
    $region2: #{tpu_custom_call.1} parent=1 // loop_pre_header
      _
    $region3: #{tpu_custom_call.1} parent=1 // loop_header
      %s19 = sphi 0, %s23
      %p20 = scmp.ge.s32.totalorder %s19, 4
      %s26 = sphi 0, %s38
      %s27 = sphi 0, %s34
      %s28 = sphi 0, %s26
      %s29 = sphi 0, %s27
      %s30 = sphi 0, %s28
      %s31 = sphi 0, %s29
      %s43 = sphi 0, %s45
      %s46 = sphi 0, %s43
      %s47 = sphi 0, %s46
      %s63 = sphi 0, %s47
      %s67 = sphi 0, %s67
      %s69 = sphi 0, %s67
      %s70 = sphi 0, %s69
      %s84 = sphi 0, %s70
      %s88 = sphi 0, %s88
      %s90 = sphi 0, %s88
      %s91 = sphi 0, %s90
      %s105 = sphi 0, %s91
      %s111 = sphi 0, %s113
      %s114 = sphi 0, %s111
      %s115 = sphi 0, %s114
      %s131 = sphi 0, %s115
      %s135 = sphi 0, %s135
      %s137 = sphi 0, %s135
      %s138 = sphi 0, %s137
      %s152 = sphi 0, %s138
      %s160 = sphi 0, %s162
      %s163 = sphi 0, %s160
      %s164 = sphi 0, %s163
      %s180 = sphi 0, %s164
    $region4: #{tpu_custom_call.1} parent=1 // loop_header_branch
      %22 = sbr.rel (%p20) target = $region8
    $region5: #{tpu_custom_call.1} parent=1 // loop_body
      %s24 = ssub.s32 %s19, 1
      %s25 = ssub.s32 %s19, 2
      %s32 = sadd.s32 1, %s27
      %p33 = scmp.ge.s32.totalorder %s32, 1
      %s34 = scalar_select %p33, 0, %s32
      %s35 = sadd.s32 1, %s26
      %s36 = scalar_select %p33, %s35, %s26
      %p37 = scmp.ge.s32.totalorder %s36, 2
      %s38 = scalar_select %p37, 0, %s36
      %s39 = ssub.s32 %s26, %s38
      %s40 = ssub.s32 %s27, %s34
      %s41 = sor.u32 %s39, %s40
      %p42 = scmp.eq.s32.totalorder %s41, 0
      %s44 = sadd.s32 %s43, 1
      %s45 = scalar_select %p42, %s43, %s44
      %p48 = pneg %p42
      %p49 = scmp.eq.s32.totalorder %s19, 1
      %p50 = por %p48, %p49
      %p51 = scmp.ne.s32.totalorder %s43, %s46
      %p52 = scmp.eq.s32.totalorder %s19, 0
      %p53 = por %p51, %p52
      %p54 = scmp.ne.s32.totalorder %s43, %s46
      %p55 = scmp.eq.s32.totalorder %s24, 1
      %p56 = por %p54, %p55
      %p57 = scmp.ne.s32.totalorder %s46, %s47
      %p58 = scmp.eq.s32.totalorder %s24, 0
      %p59 = por %p57, %p58
      %p60 = scmp.ne.s32.totalorder %s46, %s47
      %p61 = scmp.eq.s32.totalorder %s25, 1
      %p62 = por %p60, %p61
      %p64 = scmp.ne.s32.totalorder %s47, %s63
      %p65 = scmp.eq.s32.totalorder %s25, 0
      %p66 = por %p64, %p65
      %s68 = sadd.s32 %s67, 1
      %p71 = scmp.eq.s32.totalorder %s19, 1
      %p72 = scmp.ne.s32.totalorder %s67, %s69
      %p73 = scmp.eq.s32.totalorder %s19, 0
      %p74 = por %p72, %p73
      %p75 = scmp.ne.s32.totalorder %s67, %s69
      %p76 = scmp.eq.s32.totalorder %s24, 1
      %p77 = por %p75, %p76
      %p78 = scmp.ne.s32.totalorder %s69, %s70
      %p79 = scmp.eq.s32.totalorder %s24, 0
      %p80 = por %p78, %p79
      %p81 = scmp.ne.s32.totalorder %s69, %s70
      %p82 = scmp.eq.s32.totalorder %s25, 1
      %p83 = por %p81, %p82
      %p85 = scmp.ne.s32.totalorder %s70, %s84
      %p86 = scmp.eq.s32.totalorder %s25, 0
      %p87 = por %p85, %p86
      %s89 = sadd.s32 %s88, 1
      %p92 = scmp.eq.s32.totalorder %s19, 1
      %p93 = scmp.ne.s32.totalorder %s88, %s90
      %p94 = scmp.eq.s32.totalorder %s19, 0
      %p95 = por %p93, %p94
      %p96 = scmp.ne.s32.totalorder %s88, %s90
      %p97 = scmp.eq.s32.totalorder %s24, 1
      %p98 = por %p96, %p97
      %p99 = scmp.ne.s32.totalorder %s90, %s91
      %p100 = scmp.eq.s32.totalorder %s24, 0
      %p101 = por %p99, %p100
      %p102 = scmp.ne.s32.totalorder %s90, %s91
      %p103 = scmp.eq.s32.totalorder %s25, 1
      %p104 = por %p102, %p103
      %p106 = scmp.ne.s32.totalorder %s91, %s105
      %p107 = scmp.eq.s32.totalorder %s25, 0
      %p108 = por %p106, %p107
      %s109 = ssub.s32 %s27, %s34
      %p110 = scmp.eq.s32.totalorder %s109, 0
      %s112 = sadd.s32 %s111, 1
      %s113 = scalar_select %p110, %s111, %s112
      %p116 = pneg %p110
      %p117 = scmp.eq.s32.totalorder %s19, 1
      %p118 = por %p116, %p117
      %p119 = scmp.ne.s32.totalorder %s111, %s114
      %p120 = scmp.eq.s32.totalorder %s19, 0
      %p121 = por %p119, %p120
      %p122 = scmp.ne.s32.totalorder %s111, %s114
      %p123 = scmp.eq.s32.totalorder %s24, 1
      %p124 = por %p122, %p123
      %p125 = scmp.ne.s32.totalorder %s114, %s115
      %p126 = scmp.eq.s32.totalorder %s24, 0
      %p127 = por %p125, %p126
      %p128 = scmp.ne.s32.totalorder %s114, %s115
      %p129 = scmp.eq.s32.totalorder %s25, 1
      %p130 = por %p128, %p129
      %p132 = scmp.ne.s32.totalorder %s115, %s131
      %p133 = scmp.eq.s32.totalorder %s25, 0
      %p134 = por %p132, %p133
      %s136 = sadd.s32 %s135, 1
      %p139 = scmp.eq.s32.totalorder %s19, 1
      %p140 = scmp.ne.s32.totalorder %s135, %s137
      %p141 = scmp.eq.s32.totalorder %s19, 0
      %p142 = por %p140, %p141
      %p143 = scmp.ne.s32.totalorder %s135, %s137
      %p144 = scmp.eq.s32.totalorder %s24, 1
      %p145 = por %p143, %p144
      %p146 = scmp.ne.s32.totalorder %s137, %s138
      %p147 = scmp.eq.s32.totalorder %s24, 0
      %p148 = por %p146, %p147
      %p149 = scmp.ne.s32.totalorder %s137, %s138
      %p150 = scmp.eq.s32.totalorder %s25, 1
      %p151 = por %p149, %p150
      %p153 = scmp.ne.s32.totalorder %s138, %s152
      %p154 = scmp.eq.s32.totalorder %s25, 0
      %p155 = por %p153, %p154
      %s156 = ssub.s32 %s26, %s38
      %s157 = ssub.s32 %s27, %s34
      %s158 = sor.u32 %s156, %s157
      %p159 = scmp.eq.s32.totalorder %s158, 0
      %s161 = sadd.s32 %s160, 1
      %s162 = scalar_select %p159, %s160, %s161
      %p165 = pneg %p159
      %p166 = scmp.eq.s32.totalorder %s19, 1
      %p167 = por %p165, %p166
      %p168 = scmp.ne.s32.totalorder %s160, %s163
      %p169 = scmp.eq.s32.totalorder %s19, 0
      %p170 = por %p168, %p169
      %p171 = scmp.ne.s32.totalorder %s160, %s163
      %p172 = scmp.eq.s32.totalorder %s24, 1
      %p173 = por %p171, %p172
      %p174 = scmp.ne.s32.totalorder %s163, %s164
      %p175 = scmp.eq.s32.totalorder %s24, 0
      %p176 = por %p174, %p175
      %p177 = scmp.ne.s32.totalorder %s163, %s164
      %p178 = scmp.eq.s32.totalorder %s25, 1
      %p179 = por %p177, %p178
      %p181 = scmp.ne.s32.totalorder %s164, %s180
      %p182 = scmp.eq.s32.totalorder %s25, 0
      %p183 = por %p181, %p182
      %p184 = scmp.le.s32.totalorder 1, %s19
      %p185 = scmp.lt.s32.totalorder %s19, 3
      %p186 = pnand %p184, %p185
      %p187 = pneg %p186
      // Predicated region
      $region9: #{tpu_custom_call.1} parent=5 // pred_check
        _
      $region10: #{tpu_custom_call.1} parent=5 // pred_check_branch
        %189 = sbr.rel (%p186) target = $region12
      $region11: #{tpu_custom_call.1} parent=5 // pred_region
        %s190 = ssub.s32 %s19, 1
        // Predicated region
        $region13: #{tpu_custom_call.1} parent=11 // pred_check
          %p191 = pneg %p80
        $region14: #{tpu_custom_call.1} parent=11 // pred_check_branch
          %193 = sbr.rel (%p191) target = $region16
        $region15: #{tpu_custom_call.1} parent=11 // pred_region
          %s195 = ssub.s32 2048, 2048
          %196 = vsyncadd [#allocation7], %s195
          %s197 = sshll.u32 [#allocation6], 4
          %s198 = int_to_ptr.vmem [resolvable:$true] %s197
          %203 = dma.hbm_to_vmem [thread:$0]  %s1, 2048, %s198, [#allocation7], 128, 128, 8
        $region16: #{tpu_custom_call.1} parent=11 // pred_fallthru
          _
        // Predicated region
        $region17: #{tpu_custom_call.1} parent=11 // pred_check
          %p204 = pneg %p101
        $region18: #{tpu_custom_call.1} parent=11 // pred_check_branch
          %206 = sbr.rel (%p204) target = $region20
        $region19: #{tpu_custom_call.1} parent=11 // pred_region
          _
        $region20: #{tpu_custom_call.1} parent=11 // pred_fallthru
          _
        // Predicated region
        $region21: #{tpu_custom_call.1} parent=11 // pred_check
          %p207 = pneg %p127
        $region22: #{tpu_custom_call.1} parent=11 // pred_check_branch
          %209 = sbr.rel (%p207) target = $region24
        $region23: #{tpu_custom_call.1} parent=11 // pred_region
          %s211 = ssub.s32 128, 128
          %212 = vsyncadd [#allocation7], %s211
          %s213 = smul.addr %s29, 128
          %s214 = scalar_lea.hbm %s3, %s213
          %s216 = sshll.u32 [#allocation8], 4
          %s217 = int_to_ptr.vmem [resolvable:$true] %s216
          %219 = dma.hbm_to_vmem [thread:$0]  %s214, 128, %s217, [#allocation7]
        $region24: #{tpu_custom_call.1} parent=11 // pred_fallthru
          _
        // Predicated region
        $region25: #{tpu_custom_call.1} parent=11 // pred_check
          %p220 = pneg %p148
        $region26: #{tpu_custom_call.1} parent=11 // pred_check_branch
          %222 = sbr.rel (%p220) target = $region28
        $region27: #{tpu_custom_call.1} parent=11 // pred_region
          _
        $region28: #{tpu_custom_call.1} parent=11 // pred_fallthru
          _
      $region12: #{tpu_custom_call.1} parent=5 // pred_fallthru
        _
      %p223 = scmp.lt.s32.totalorder %s19, 2
      // Predicated region
      $region29: #{tpu_custom_call.1} parent=5 // pred_check
        %p224 = pneg %p223
      $region30: #{tpu_custom_call.1} parent=5 // pred_check_branch
        %226 = sbr.rel (%p224) target = $region32
      $region31: #{tpu_custom_call.1} parent=5 // pred_region
        // Predicated region
        $region33: #{tpu_custom_call.1} parent=31 // pred_check
          %p227 = pneg %p53
        $region34: #{tpu_custom_call.1} parent=31 // pred_check_branch
          %229 = sbr.rel (%p227) target = $region36
        $region35: #{tpu_custom_call.1} parent=31 // pred_region
          %s230 = sand.u32 %s43, 1
          %s231 = scalar_lea.sflag [#allocation4], %s230
          %s232 = sand.u32 %s43, 1
          %s233 = smul.addr %s232, 8
          %s234 = scalar_lea.vmem [#allocation3], %s233
          %s236 = ssub.s32 128, 128
          %237 = vsyncadd %s231, %s236
          %s238 = sadd.s32 %s27, %s26
          %s239 = smul.addr %s238, 128
          %s240 = scalar_lea.hbm %s0, %s239
          %s242 = sshll.u32 %s234, 4
          %s243 = int_to_ptr.vmem [resolvable:$true] %s242
          %245 = dma.hbm_to_vmem [thread:$0]  %s240, 128, %s243, %s231
        $region36: #{tpu_custom_call.1} parent=31 // pred_fallthru
          _
      $region32: #{tpu_custom_call.1} parent=5 // pred_fallthru
        _
      %p246 = scmp.le.s32.totalorder 1, %s19
      %p247 = scmp.lt.s32.totalorder %s19, 3
      %p248 = pnand %p246, %p247
      %p249 = pneg %p248
      // Predicated region
      $region37: #{tpu_custom_call.1} parent=5 // pred_check
        _
      $region38: #{tpu_custom_call.1} parent=5 // pred_check_branch
        %251 = sbr.rel (%p248) target = $region40
      $region39: #{tpu_custom_call.1} parent=5 // pred_region
        %s252 = ssub.s32 %s19, 1
        %s253 = sand.u32 %s46, 1
        %s254 = scalar_lea.sflag [#allocation4], %s253
        %s255 = sand.u32 %s46, 1
        %s256 = smul.addr %s255, 8
        %s257 = scalar_lea.vmem [#allocation3], %s256
        // Predicated region
        $region41: #{tpu_custom_call.1} parent=39 // pred_check
          %p258 = pneg %p59
        $region42: #{tpu_custom_call.1} parent=39 // pred_check_branch
          %260 = sbr.rel (%p258) target = $region44
        $region43: #{tpu_custom_call.1} parent=39 // pred_region
          %261 = dma.done %s254, 128
        $region44: #{tpu_custom_call.1} parent=39 // pred_fallthru
          _
        // Predicated region
        $region45: #{tpu_custom_call.1} parent=39 // pred_check
          %p262 = pneg %p80
        $region46: #{tpu_custom_call.1} parent=39 // pred_check_branch
          %264 = sbr.rel (%p262) target = $region48
        $region47: #{tpu_custom_call.1} parent=39 // pred_region
          %265 = dma.done [#allocation7], 2048
        $region48: #{tpu_custom_call.1} parent=39 // pred_fallthru
          _
        // Predicated region
        $region49: #{tpu_custom_call.1} parent=39 // pred_check
          %p266 = pneg %p127
        $region50: #{tpu_custom_call.1} parent=39 // pred_check_branch
          %268 = sbr.rel (%p266) target = $region52
        $region51: #{tpu_custom_call.1} parent=39 // pred_region
          %269 = dma.done [#allocation7], 128
        $region52: #{tpu_custom_call.1} parent=39 // pred_fallthru
          _
        %s270 = sand.u32 %s46, 1
        %s271 = scalar_lea.sflag [#allocation4], %s270
        %s272 = sand.u32 %s46, 1
        %s273 = smul.addr %s272, 8
        %s274 = scalar_lea.vmem [#allocation3], %s273
        %p275 = pneg %p59
        %p276 = pneg %p56
        %p277 = pneg %p80
        %p278 = pneg %p77
        %p279 = pneg %p101
        %p280 = pneg %p98
        %p281 = pneg %p127
        %p282 = pneg %p124
        %p283 = pneg %p148
        %p284 = pneg %p145
        %p285 = pneg %p176
        %p286 = pneg %p173
        %s287 = sand.u32 %s163, 1
        %s288 = scalar_lea.sflag [#allocation5], %s287
        %s289 = sand.u32 %s163, 1
        %s290 = smul.addr %s289, 8
        %s291 = scalar_lea.vmem [#allocation9], %s290
        %v292 = vld [vmem:[%s257] sm:$0xff]
        %v293 = vld [vmem:[#allocation6] sm:$0xff]
        %v294 = vld [vmem:[#allocation6 + $0x8] sm:$0xff]
        %v295 = vld [vmem:[#allocation6 + $0x10] sm:$0xff]
        %v296 = vld [vmem:[#allocation6 + $0x18] sm:$0xff]
        %v297 = vld [vmem:[#allocation6 + $0x20] sm:$0xff]
        %v298 = vld [vmem:[#allocation6 + $0x28] sm:$0xff]
        %v299 = vld [vmem:[#allocation6 + $0x30] sm:$0xff]
        %v300 = vld [vmem:[#allocation6 + $0x38] sm:$0xff]
        %v301 = vld [vmem:[#allocation6 + $0x40] sm:$0xff]
        %v302 = vld [vmem:[#allocation6 + $0x48] sm:$0xff]
        %v303 = vld [vmem:[#allocation6 + $0x50] sm:$0xff]
        %v304 = vld [vmem:[#allocation6 + $0x58] sm:$0xff]
        %v305 = vld [vmem:[#allocation6 + $0x60] sm:$0xff]
        %v306 = vld [vmem:[#allocation6 + $0x68] sm:$0xff]
        %v307 = vld [vmem:[#allocation6 + $0x70] sm:$0xff]
        %v308 = vld [vmem:[#allocation6 + $0x78] sm:$0xff]
        %v309 = vld [vmem:[%s2] sm:$0x1]
        %v310 = vlaneseq
        %v311 = vshrl.u32 %v310, 7
        %v312 = vsub.s32 0, %v311
        %v313 = vrot.slane %v309, %v312
        %314 = vmatprep.subr.mxu0 0.0
        %315 = vmatpush1.msra.mxu0 %v308
        %316 = vmatprep.subr.mxu0 0.0
        %317 = vmatpush1.msra.mxu0 %v307
        %318 = vmatprep.subr.mxu0 0.0
        %319 = vmatpush1.msra.mxu0 %v306
        %320 = vmatprep.subr.mxu0 0.0
        %321 = vmatpush1.msra.mxu0 %v305
        %322 = vmatprep.subr.mxu0 0.0
        %323 = vmatpush1.msra.mxu0 %v304
        %324 = vmatprep.subr.mxu0 0.0
        %325 = vmatpush1.msra.mxu0 %v303
        %326 = vmatprep.subr.mxu0 0.0
        %327 = vmatpush1.msra.mxu0 %v302
        %328 = vmatprep.subr.mxu0 0.0
        %329 = vmatpush1.msra.mxu0 %v301
        %330 = vmatprep.subr.mxu0 0.0
        %331 = vmatpush1.msra.mxu0 %v300
        %332 = vmatprep.subr.mxu0 0.0
        %333 = vmatpush1.msra.mxu0 %v299
        %334 = vmatprep.subr.mxu0 0.0
        %335 = vmatpush1.msra.mxu0 %v298
        %336 = vmatprep.subr.mxu0 0.0
        %337 = vmatpush1.msra.mxu0 %v297
        %338 = vmatprep.subr.mxu0 0.0
        %339 = vmatpush1.msra.mxu0 %v296
        %340 = vmatprep.subr.mxu0 0.0
        %341 = vmatpush1.msra.mxu0 %v295
        %342 = vmatprep.subr.mxu0 0.0
        %343 = vmatpush1.msra.mxu0 %v294
        %344 = vmatprep.subr.mxu0 0.0
        %345 = vmatpush1.msra.mxu0 %v293
        %346 = vmatprep.subr.mxu0 0.0
        %347 = vmatpush2.msra.mxu0 0.0
        %348 = vmatprep.subr.mxu0 0.0
        %349 = vmatpush2.msra.mxu0 0.0
        %350 = vmatprep.subr.mxu0 0.0
        %351 = vmatpush2.msra.mxu0 0.0
        %352 = vmatprep.subr.mxu0 0.0
        %353 = vmatpush2.msra.mxu0 0.0
        %354 = vmatprep.subr.mxu0 0.0
        %355 = vmatpush2.msra.mxu0 0.0
        %356 = vmatprep.subr.mxu0 0.0
        %357 = vmatpush2.msra.mxu0 0.0
        %358 = vmatprep.subr.mxu0 0.0
        %359 = vmatpush2.msra.mxu0 0.0
        %360 = vmatprep.subr.mxu0 0.0
        %361 = vmatpush2.msra.mxu0 0.0
        %362 = vmatprep.subr.mxu0 0.0
        %363 = vmatpush2.msra.mxu0 0.0
        %364 = vmatprep.subr.mxu0 0.0
        %365 = vmatpush2.msra.mxu0 0.0
        %366 = vmatprep.subr.mxu0 0.0
        %367 = vmatpush2.msra.mxu0 0.0
        %368 = vmatprep.subr.mxu0 0.0
        %369 = vmatpush2.msra.mxu0 0.0
        %370 = vmatprep.subr.mxu0 0.0
        %371 = vmatpush2.msra.mxu0 0.0
        %372 = vmatprep.subr.mxu0 0.0
        %373 = vmatpush2.msra.mxu0 0.0
        %374 = vmatprep.subr.mxu0 0.0
        %375 = vmatpush2.msra.mxu0 0.0
        %376 = vmatprep.subr.mxu0 0.0
        %377 = vmatpush2.msra.mxu0 0.0
        %378 = vmatprep.mubr.f32.mxu0 0.0
        %379 = vmatmul.mubr.f32.gmra.mxu0 %v292
        %v380 = vpop.f32.mrf.mxu0
        %v381 = vadd.f32 %v313, %v380
        %v382 = vpop.f32.mrf.mxu0
        %383 = vdwg.mxu0
        %384 = vadd.xlane.f32.xlu0 %v381
        %v385 = vpop.xlane.xlu0 %384
        %v386 = vmul.f32 %v385, 0.03125
        %v387 = vmul.f32 %v381, %v381
        %388 = vadd.xlane.f32.xlu0 %v387
        %v389 = vpop.xlane.xlu0 %388
        %v390 = vmul.f32 %v389, 0.03125
        %v391 = vmul.f32 %v386, %v386
        %v392 = vsub.f32 %v390, %v391
        %v393 = vmax.f32 %v392, 0.0
        %v394 = vsub.f32 %v381, %v386
        %v395 = vadd.f32 %v393, 1e-05
        %v396 = vrsqrt.pop %v395
        %v397 = vmul.f32 %v394, %v396
        %v398 = vld [vmem:[%s2 + $0x1] sm:$0x1]
        %v399 = vlaneseq
        %v400 = vshrl.u32 %v399, 7
        %v401 = vsub.s32 0, %v400
        %v402 = vrot.slane %v398, %v401
        %v403 = vmul.f32 %v397, %v402
        %v404 = vld [vmem:[%s2 + $0x2] sm:$0x1]
        %v405 = vlaneseq
        %v406 = vshrl.u32 %v405, 7
        %v407 = vsub.s32 0, %v406
        %v408 = vrot.slane %v404, %v407
        %v409 = vadd.f32 %v403, %v408
        %v410 = vmul.f32 %v409, 0.5
        %v411 = vmul.f32 %v409, 0.044715
        %v412 = vmul.f32 %v411, %v409
        %v413 = vmul.f32 %v412, %v409
        %v414 = vadd.f32 %v409, %v413
        %v415 = vmul.f32 %v414, 0.7978846
        %v416 = vtanh.pop %v415
        %v417 = vadd.f32 %v416, 1.0
        %v418 = vmul.f32 %v410, %v417
        %s419 = sld [smem:[#allocation2]]
        %v420 = vld [vmem:[#allocation8] sm:$0xff]
        %v421 = vstv %s419
        %v422 = vmul.f32 %v421, %v420
        %v423 = vadd.f32 %v418, %v422
        %424 = vst [vmem:[%s291] sm:$0xff] %v423
        %s425 = sand.u32 %s163, 1
        %s426 = scalar_lea.sflag [#allocation5], %s425
        %s427 = sand.u32 %s163, 1
        %s428 = smul.addr %s427, 8
        %s429 = scalar_lea.vmem [#allocation9], %s428
        // Predicated region
        $region53: #{tpu_custom_call.1} parent=39 // pred_check
          %p430 = pneg %p173
        $region54: #{tpu_custom_call.1} parent=39 // pred_check_branch
          %432 = sbr.rel (%p430) target = $region56
        $region55: #{tpu_custom_call.1} parent=39 // pred_region
          %s434 = ssub.s32 128, 128
          %435 = vsyncadd %s426, %s434
          %s436 = sadd.s32 %s29, %s28
          %s437 = smul.addr %s436, 128
          %s438 = scalar_lea.hbm %s5, %s437
          %s440 = sshll.u32 %s429, 4
          %s441 = int_to_ptr.vmem [resolvable:$true] %s440
          %443 = dma.vmem_to_hbm [thread:$0]  %s441, 128, %s438, %s426
        $region56: #{tpu_custom_call.1} parent=39 // pred_fallthru
          _
      $region40: #{tpu_custom_call.1} parent=5 // pred_fallthru
        _
      %p444 = scmp.le.s32.totalorder 2, %s19
      // Predicated region
      $region57: #{tpu_custom_call.1} parent=5 // pred_check
        %p445 = pneg %p444
      $region58: #{tpu_custom_call.1} parent=5 // pred_check_branch
        %447 = sbr.rel (%p445) target = $region60
      $region59: #{tpu_custom_call.1} parent=5 // pred_region
        %s448 = ssub.s32 %s19, 2
        // Predicated region
        $region61: #{tpu_custom_call.1} parent=59 // pred_check
          %p449 = pneg %p179
        $region62: #{tpu_custom_call.1} parent=59 // pred_check_branch
          %451 = sbr.rel (%p449) target = $region64
        $region63: #{tpu_custom_call.1} parent=59 // pred_region
          %s452 = sand.u32 %s164, 1
          %s453 = scalar_lea.sflag [#allocation5], %s452
          %s454 = sand.u32 %s164, 1
          %s455 = smul.addr %s454, 8
          %s456 = scalar_lea.vmem [#allocation9], %s455
          %457 = dma.done %s453, 128
        $region64: #{tpu_custom_call.1} parent=59 // pred_fallthru
          _
      $region60: #{tpu_custom_call.1} parent=5 // pred_fallthru
        _
    $region6: #{tpu_custom_call.1} parent=1 // loop_footer
      %s23 = sadd.s32 1, %s19
    $region7: #{tpu_custom_call.1} parent=1 // loop_footer_branch
      %18 = sbr.rel target = $region3
    $region8: #{tpu_custom_call.1} parent=1 // loop_exit
      _
    %458 = vsyncpa [#allocation4], 1
    %s459 = scalar_lea.sflag [#allocation4], 1
    %460 = vsyncpa %s459, 1
    %461 = vsyncpa [#allocation7], 1
    %462 = vsyncpa [#allocation5], 1
    %s463 = scalar_lea.sflag [#allocation5], 1
    %464 = vsyncpa %s463, 1

</llo_original>
